<compile_context>
chip_gen: v6e
topology: v6e:2x2x1
jax: 0.10.0
libtpu: 0.0.40
codegen_flags: <defaults>
</compile_context>

<pallas_src>
import jax
import jax.numpy as jnp
import numpy as np
from jax import lax
from jax.experimental import pallas as pl
from jax.experimental.pallas import tpu as pltpu

DILATIONS = (1, 3, 5, 7)
BN_EPS = 1e-5


def _make_kernel(H, W, Cin, Cout, dys, pad):
    WC_in = W * Cin
    WC_out = W * Cout

    def kernel(x_ref, m_ref, b_ref, o_ref, xr_ref):
        # x_ref : (1, H, W*Cin)        un-padded input rows (one batch elem)
        # m_ref : (n_dy, W*Cin, W*Cout) folded row-shift weight matrices
        # b_ref : (1, W*Cout)           folded bias (all BN biases merged)
        # o_ref : (1, H, W*Cout)        lane-dense output slab
        # xr_ref: (H + 2*pad, W*Cin)    VMEM scratch with zero row-halo
        xr_ref[...] = jnp.zeros_like(xr_ref)          # zero halos (in-VMEM, cheap)
        xr_ref[pad:pad + H, :] = x_ref[0]             # valid rows

        acc = None
        for i, dy in enumerate(dys):                  # 9 static iterations
            a = xr_ref[pad + dy:pad + dy + H, :]      # (H, W*Cin) row-shifted view
            p = jnp.dot(a, m_ref[i],                  # MXU: (H,WCin)x(WCin,WCout)
                        preferred_element_type=jnp.float32)
            acc = p if acc is None else acc + p

        o_ref[0] = jnp.maximum(acc + b_ref[...], 0.0).astype(o_ref.dtype)

    return kernel


def skip_basic_pallas(x_nchw, Ms, bias_row, dys, pad):
    """x_nchw: (N, Cin, H, W) float32 -> (N, Cout, H, W) float32 (NCHW, like PyTorch)."""
    N, Cin, H, W = x_nchw.shape
    WC_out = Ms.shape[-1]
    Cout = WC_out // W
    WC_in = W * Cin
    n_dy = Ms.shape[0]

    # Layout plumbing only (free reshapes / one tiny transpose); no compute hoisted.
    x_flat = jnp.transpose(x_nchw, (0, 2, 3, 1)).reshape(N, H, WC_in)

    kernel = _make_kernel(H, W, Cin, Cout, dys, pad)

    flops = int(N * n_dy * 2 * H * WC_in * WC_out)
    bytes_accessed = int(4 * (N * H * WC_in + Ms.size + bias_row.size + N * H * WC_out))

    out_flat = pl.pallas_call(
        kernel,
        out_shape=jax.ShapeDtypeStruct((N, H, WC_out), jnp.float32),
        grid=(N,),
        in_specs=[
            pl.BlockSpec((1, H, WC_in), lambda n: (n, 0, 0)),
            pl.BlockSpec((n_dy, WC_in, WC_out), lambda n: (0, 0, 0)),
            pl.BlockSpec((1, WC_out), lambda n: (0, 0)),
        ],
        out_specs=pl.BlockSpec((1, H, WC_out), lambda n: (n, 0, 0)),
        scratch_shapes=[pltpu.VMEM((H + 2 * pad, WC_in), jnp.float32)],
        compiler_params=pltpu.CompilerParams(
            dimension_semantics=("parallel",)),
        cost_estimate=pl.CostEstimate(flops=flops, transcendentals=0,
                                      bytes_accessed=bytes_accessed),
    )(x_flat, Ms, bias_row)

    # (N, H, W*Cout) -> (N, H, W, Cout) -> NCHW
    return jnp.transpose(out_flat.reshape(N, H, W, Cout), (0, 3, 1, 2))


def _pack_params(w_dil, bn_dil, w_skip, bn_skip, H, W, Cin, Cout, dilations):
    """Fold convs + eval-mode BN + skip into 9 row-shift matrices and one bias row."""
    n_br = len(dilations)
    Cb = Cout // n_br
    dys = sorted({(ky - 1) * d for d in dilations for ky in range(3)})
    dy_index = {dy: i for i, dy in enumerate(dys)}

    Ms = np.zeros((len(dys), W * Cin, W * Cout), np.float32)
    bias = np.zeros((W * Cout,), np.float32)

    # Dilated branches (block-diagonal over Cout, folded BN scale into weights).
    for b, d in enumerate(dilations):
        g, be, m, v = [np.asarray(t, np.float32) for t in bn_dil[b]]
        scale = g / np.sqrt(v + BN_EPS)                    # [Cb]
        bbias = be - m * scale                             # [Cb]
        wb = np.asarray(w_dil[b], np.float32)              # [3,3,Cin,Cb] HWIO
        for ky in range(3):
            mi = dy_index[(ky - 1) * d]
            for kx in range(3):
                dx = (kx - 1) * d
                wtap = wb[ky, kx] * scale[None, :]         # [Cin, Cb]
                for x in range(W):
                    xx = x + dx
                    if 0 <= xx < W:                        # OOB -> zero pad -> omit
                        Ms[mi,
                           xx * Cin:(xx + 1) * Cin,
                           x * Cout + b * Cb:x * Cout + (b + 1) * Cb] += wtap
        for x in range(W):
            bias[x * Cout + b * Cb:x * Cout + (b + 1) * Cb] += bbias

    # Skip path (1x1 conv + BN) folded into the dy=0 matrix and the bias.
    gs, bes, ms_, vs = [np.asarray(t, np.float32) for t in bn_skip]
    sscale = gs / np.sqrt(vs + BN_EPS)                     # [Cout]
    sbias = bes - ms_ * sscale
    ws = np.asarray(w_skip, np.float32)[0, 0] * sscale[None, :]   # [Cin, Cout]
    mi0 = dy_index[0]
    for x in range(W):
        Ms[mi0, x * Cin:(x + 1) * Cin, x * Cout:(x + 1) * Cout] += ws
        bias[x * Cout:(x + 1) * Cout] += sbias

    return jnp.asarray(Ms), jnp.asarray(bias)[None, :], dys


def _reference(x_nhwc, w_dil, bn_dil, w_skip, bn_skip):
    """Pure-JAX reference (lax conv) mirroring the PyTorch forward (eval BN)."""
    outs = []
    for b, d in enumerate(DILATIONS):
        y = lax.conv_general_dilated(
            x_nhwc, w_dil[b], window_strides=(1, 1),
            padding=[(d, d), (d, d)], rhs_dilation=(d, d),
            dimension_numbers=('NHWC', 'HWIO', 'NHWC'))
        g, be, m, v = bn_dil[b]
        outs.append((y - m) / jnp.sqrt(v + BN_EPS) * g + be)
    cat = jnp.concatenate(outs, axis=-1)
    s = lax.conv_general_dilated(
        x_nhwc, w_skip, window_strides=(1, 1), padding='VALID',
        dimension_numbers=('NHWC', 'HWIO', 'NHWC'))
    g, be, m, v = bn_skip
    s = (s - m) / jnp.sqrt(v + BN_EPS) * g + be
    return jnp.maximum(cat + s, 0.0)


if __name__ == "__main__":
    key = jax.random.PRNGKey(0)
    N, Cin, H, W = 2, 4, 16, 16
    Cout = 8                         # out_channel; each dilated branch -> Cout//4
    Cb = Cout // 4
    pad = max(DILATIONS)

    keys = jax.random.split(key, 16)
    x_nchw = jax.random.normal(keys[0], (N, Cin, H, W), jnp.float32)
    x_nhwc = jnp.transpose(x_nchw, (0, 2, 3, 1))

    # Deterministic parameter init (Conv2d bias=False; conv1x1 bias=False).
    w_dil = []       # HWIO [3,3,Cin,Cb] per branch
    bn_dil = []      # (gamma, beta, running_mean, running_var) per branch
    for b in range(4):
        w_dil.append(0.1 * jax.random.normal(keys[1 + b], (3, 3, Cin, Cb),
                                             jnp.float32))
        g = 1.0 + 0.1 * jax.random.normal(keys[5 + b], (Cb,), jnp.float32)
        be = 0.1 * jax.random.normal(keys[9 + b], (Cb,), jnp.float32)
        m = 0.05 * jax.random.normal(keys[13], (Cb,), jnp.float32) + 0.01 * b
        v = jnp.abs(0.2 * jax.random.normal(keys[14], (Cb,), jnp.float32)) + 0.5
        bn_dil.append((g, be, m, v))

    w_skip = 0.1 * jax.random.normal(keys[15], (1, 1, Cin, Cout), jnp.float32)
    g_s = jnp.linspace(0.8, 1.2, Cout, dtype=jnp.float32)
    b_s = jnp.linspace(-0.1, 0.1, Cout, dtype=jnp.float32)
    m_s = jnp.linspace(-0.05, 0.05, Cout, dtype=jnp.float32)
    v_s = jnp.linspace(0.5, 1.5, Cout, dtype=jnp.float32)
    bn_skip = (g_s, b_s, m_s, v_s)

    # Wrapper-side folding of conv + BN + skip into the kernel's weight layout.
    Ms, bias_row, dys = _pack_params(w_dil, bn_dil, w_skip, bn_skip,
                                     H, W, Cin, Cout, DILATIONS)

    out = skip_basic_pallas(x_nchw, Ms, bias_row, dys, pad)   # NCHW
    out = jax.block_until_ready(out)
    assert out.shape == (N, Cout, H, W)

    ref_nhwc = _reference(x_nhwc, w_dil, bn_dil, w_skip, bn_skip)
    ref_nchw = jnp.transpose(ref_nhwc, (0, 3, 1, 2))
    np.testing.assert_allclose(np.asarray(out), np.asarray(ref_nchw),
                               rtol=1e-3, atol=1e-3)

    print("KERNEL_OK")
</pallas_src>

<mosaic_0001>
module attributes {stable_mosaic.version = 11 : i64} {
  func.func @kernel(%arg0: i32, %arg1: memref<1x16x64xf32, #tpu.memory_space<vmem>>, %arg2: memref<9x64x128xf32, #tpu.memory_space<vmem>>, %arg3: memref<1x128xf32, #tpu.memory_space<vmem>>, %arg4: memref<1x16x128xf32, #tpu.memory_space<vmem>>, %arg5: memref<30x64xf32, #tpu.memory_space<vmem>>) attributes {dimension_semantics = [#tpu.dimension_semantics<parallel>], iteration_bounds = array<i64: 2>, scalar_prefetch = 0 : i64, scratch_operands = 1 : i64, tpu.core_type = #tpu.core_type<tc>, window_params = [{transform_indices = @transform_0, window_bounds = array<i64: 1, 16, 64>}, {pipeline_mode = #tpu.pipeline_mode<synchronous>, transform_indices = @transform_1, window_bounds = array<i64: 9, 64, 128>}, {pipeline_mode = #tpu.pipeline_mode<synchronous>, transform_indices = @transform_2, window_bounds = array<i64: 1, 128>}, {transform_indices = @transform_3, window_bounds = array<i64: 1, 16, 128>}]} {
    %cst = arith.constant 0.000000e+00 : f32
    %0 = vector.broadcast %cst : f32 to vector<30x64xf32>
    %c0 = arith.constant 0 : index
    %c0_0 = arith.constant 0 : index
    %1 = vector.load %arg5[%c0, %c0_0] : memref<30x64xf32, #tpu.memory_space<vmem>>, vector<30x64xf32>
    tpu.vector_store %arg5[%c0, %c0_0], %0 {strides = array<i32>} : memref<30x64xf32, #tpu.memory_space<vmem>>, vector<30x64xf32>,
    %c0_1 = arith.constant 0 : index
    %c0_2 = arith.constant 0 : index
    %c0_3 = arith.constant 0 : index
    %2 = vector.load %arg1[%c0_1, %c0_2, %c0_3] : memref<1x16x64xf32, #tpu.memory_space<vmem>>, vector<1x16x64xf32>
    %3 = vector.shape_cast %2 : vector<1x16x64xf32> to vector<16x64xf32>
    %c7 = arith.constant 7 : index
    %c0_4 = arith.constant 0 : index
    %4 = vector.load %arg5[%c7, %c0_4] : memref<30x64xf32, #tpu.memory_space<vmem>>, vector<16x64xf32>
    tpu.vector_store %arg5[%c7, %c0_4], %3 {strides = array<i32>} : memref<30x64xf32, #tpu.memory_space<vmem>>, vector<16x64xf32>,
    %c0_5 = arith.constant 0 : index
    %c0_6 = arith.constant 0 : index
    %5 = vector.load %arg5[%c0_5, %c0_6] : memref<30x64xf32, #tpu.memory_space<vmem>>, vector<16x64xf32>
    %c0_7 = arith.constant 0 : index
    %c0_8 = arith.constant 0 : index
    %c0_9 = arith.constant 0 : index
    %6 = vector.load %arg2[%c0_7, %c0_8, %c0_9] : memref<9x64x128xf32, #tpu.memory_space<vmem>>, vector<1x64x128xf32>
    %7 = vector.shape_cast %6 : vector<1x64x128xf32> to vector<64x128xf32>
    %cst_10 = arith.constant dense<0.000000e+00> : vector<16x128xf32>
    %8 = tpu.matmul %5, %7, %cst_10 {dimension_numbers = #tpu.dot_dimension_numbers<[1], [0], [0], [1], [0, 0, 1, 1], [], []>} : vector<16x64xf32>, vector<64x128xf32>, vector<16x128xf32> -> vector<16x128xf32>
    %c2 = arith.constant 2 : index
    %c0_11 = arith.constant 0 : index
    %9 = vector.load %arg5[%c2, %c0_11] : memref<30x64xf32, #tpu.memory_space<vmem>>, vector<16x64xf32>
    %c1 = arith.constant 1 : index
    %c0_12 = arith.constant 0 : index
    %c0_13 = arith.constant 0 : index
    %10 = vector.load %arg2[%c1, %c0_12, %c0_13] : memref<9x64x128xf32, #tpu.memory_space<vmem>>, vector<1x64x128xf32>
    %11 = vector.shape_cast %10 : vector<1x64x128xf32> to vector<64x128xf32>
    %cst_14 = arith.constant dense<0.000000e+00> : vector<16x128xf32>
    %12 = tpu.matmul %9, %11, %cst_14 {dimension_numbers = #tpu.dot_dimension_numbers<[1], [0], [0], [1], [0, 0, 1, 1], [], []>} : vector<16x64xf32>, vector<64x128xf32>, vector<16x128xf32> -> vector<16x128xf32>
    %13 = arith.addf %8, %12 : vector<16x128xf32>
    %c4 = arith.constant 4 : index
    %c0_15 = arith.constant 0 : index
    %14 = vector.load %arg5[%c4, %c0_15] : memref<30x64xf32, #tpu.memory_space<vmem>>, vector<16x64xf32>
    %c2_16 = arith.constant 2 : index
    %c0_17 = arith.constant 0 : index
    %c0_18 = arith.constant 0 : index
    %15 = vector.load %arg2[%c2_16, %c0_17, %c0_18] : memref<9x64x128xf32, #tpu.memory_space<vmem>>, vector<1x64x128xf32>
    %16 = vector.shape_cast %15 : vector<1x64x128xf32> to vector<64x128xf32>
    %cst_19 = arith.constant dense<0.000000e+00> : vector<16x128xf32>
    %17 = tpu.matmul %14, %16, %cst_19 {dimension_numbers = #tpu.dot_dimension_numbers<[1], [0], [0], [1], [0, 0, 1, 1], [], []>} : vector<16x64xf32>, vector<64x128xf32>, vector<16x128xf32> -> vector<16x128xf32>
    %18 = arith.addf %13, %17 : vector<16x128xf32>
    %c6 = arith.constant 6 : index
    %c0_20 = arith.constant 0 : index
    %19 = vector.load %arg5[%c6, %c0_20] : memref<30x64xf32, #tpu.memory_space<vmem>>, vector<16x64xf32>
    %c3 = arith.constant 3 : index
    %c0_21 = arith.constant 0 : index
    %c0_22 = arith.constant 0 : index
    %20 = vector.load %arg2[%c3, %c0_21, %c0_22] : memref<9x64x128xf32, #tpu.memory_space<vmem>>, vector<1x64x128xf32>
    %21 = vector.shape_cast %20 : vector<1x64x128xf32> to vector<64x128xf32>
    %cst_23 = arith.constant dense<0.000000e+00> : vector<16x128xf32>
    %22 = tpu.matmul %19, %21, %cst_23 {dimension_numbers = #tpu.dot_dimension_numbers<[1], [0], [0], [1], [0, 0, 1, 1], [], []>} : vector<16x64xf32>, vector<64x128xf32>, vector<16x128xf32> -> vector<16x128xf32>
    %23 = arith.addf %18, %22 : vector<16x128xf32>
    %c7_24 = arith.constant 7 : index
    %c0_25 = arith.constant 0 : index
    %24 = vector.load %arg5[%c7_24, %c0_25] : memref<30x64xf32, #tpu.memory_space<vmem>>, vector<16x64xf32>
    %c4_26 = arith.constant 4 : index
    %c0_27 = arith.constant 0 : index
    %c0_28 = arith.constant 0 : index
    %25 = vector.load %arg2[%c4_26, %c0_27, %c0_28] : memref<9x64x128xf32, #tpu.memory_space<vmem>>, vector<1x64x128xf32>
    %26 = vector.shape_cast %25 : vector<1x64x128xf32> to vector<64x128xf32>
    %cst_29 = arith.constant dense<0.000000e+00> : vector<16x128xf32>
    %27 = tpu.matmul %24, %26, %cst_29 {dimension_numbers = #tpu.dot_dimension_numbers<[1], [0], [0], [1], [0, 0, 1, 1], [], []>} : vector<16x64xf32>, vector<64x128xf32>, vector<16x128xf32> -> vector<16x128xf32>
    %28 = arith.addf %23, %27 : vector<16x128xf32>
    %c8 = arith.constant 8 : index
    %c0_30 = arith.constant 0 : index
    %29 = vector.load %arg5[%c8, %c0_30] : memref<30x64xf32, #tpu.memory_space<vmem>>, vector<16x64xf32>
    %c5 = arith.constant 5 : index
    %c0_31 = arith.constant 0 : index
    %c0_32 = arith.constant 0 : index
    %30 = vector.load %arg2[%c5, %c0_31, %c0_32] : memref<9x64x128xf32, #tpu.memory_space<vmem>>, vector<1x64x128xf32>
    %31 = vector.shape_cast %30 : vector<1x64x128xf32> to vector<64x128xf32>
    %cst_33 = arith.constant dense<0.000000e+00> : vector<16x128xf32>
    %32 = tpu.matmul %29, %31, %cst_33 {dimension_numbers = #tpu.dot_dimension_numbers<[1], [0], [0], [1], [0, 0, 1, 1], [], []>} : vector<16x64xf32>, vector<64x128xf32>, vector<16x128xf32> -> vector<16x128xf32>
    %33 = arith.addf %28, %32 : vector<16x128xf32>
    %c10 = arith.constant 10 : index
    %c0_34 = arith.constant 0 : index
    %34 = vector.load %arg5[%c10, %c0_34] : memref<30x64xf32, #tpu.memory_space<vmem>>, vector<16x64xf32>
    %c6_35 = arith.constant 6 : index
    %c0_36 = arith.constant 0 : index
    %c0_37 = arith.constant 0 : index
    %35 = vector.load %arg2[%c6_35, %c0_36, %c0_37] : memref<9x64x128xf32, #tpu.memory_space<vmem>>, vector<1x64x128xf32>
    %36 = vector.shape_cast %35 : vector<1x64x128xf32> to vector<64x128xf32>
    %cst_38 = arith.constant dense<0.000000e+00> : vector<16x128xf32>
    %37 = tpu.matmul %34, %36, %cst_38 {dimension_numbers = #tpu.dot_dimension_numbers<[1], [0], [0], [1], [0, 0, 1, 1], [], []>} : vector<16x64xf32>, vector<64x128xf32>, vector<16x128xf32> -> vector<16x128xf32>
    %38 = arith.addf %33, %37 : vector<16x128xf32>
    %c12 = arith.constant 12 : index
    %c0_39 = arith.constant 0 : index
    %39 = vector.load %arg5[%c12, %c0_39] : memref<30x64xf32, #tpu.memory_space<vmem>>, vector<16x64xf32>
    %c7_40 = arith.constant 7 : index
    %c0_41 = arith.constant 0 : index
    %c0_42 = arith.constant 0 : index
    %40 = vector.load %arg2[%c7_40, %c0_41, %c0_42] : memref<9x64x128xf32, #tpu.memory_space<vmem>>, vector<1x64x128xf32>
    %41 = vector.shape_cast %40 : vector<1x64x128xf32> to vector<64x128xf32>
    %cst_43 = arith.constant dense<0.000000e+00> : vector<16x128xf32>
    %42 = tpu.matmul %39, %41, %cst_43 {dimension_numbers = #tpu.dot_dimension_numbers<[1], [0], [0], [1], [0, 0, 1, 1], [], []>} : vector<16x64xf32>, vector<64x128xf32>, vector<16x128xf32> -> vector<16x128xf32>
    %43 = arith.addf %38, %42 : vector<16x128xf32>
    %c14 = arith.constant 14 : index
    %c0_44 = arith.constant 0 : index
    %44 = vector.load %arg5[%c14, %c0_44] : memref<30x64xf32, #tpu.memory_space<vmem>>, vector<16x64xf32>
    %c8_45 = arith.constant 8 : index
    %c0_46 = arith.constant 0 : index
    %c0_47 = arith.constant 0 : index
    %45 = vector.load %arg2[%c8_45, %c0_46, %c0_47] : memref<9x64x128xf32, #tpu.memory_space<vmem>>, vector<1x64x128xf32>
    %46 = vector.shape_cast %45 : vector<1x64x128xf32> to vector<64x128xf32>
    %cst_48 = arith.constant dense<0.000000e+00> : vector<16x128xf32>
    %47 = tpu.matmul %44, %46, %cst_48 {dimension_numbers = #tpu.dot_dimension_numbers<[1], [0], [0], [1], [0, 0, 1, 1], [], []>} : vector<16x64xf32>, vector<64x128xf32>, vector<16x128xf32> -> vector<16x128xf32>
    %48 = arith.addf %43, %47 : vector<16x128xf32>
    %c0_49 = arith.constant 0 : index
    %c0_50 = arith.constant 0 : index
    %49 = vector.load %arg3[%c0_49, %c0_50] : memref<1x128xf32, #tpu.memory_space<vmem>>, vector<1x128xf32>
    %50 = vector.broadcast %49 : vector<1x128xf32> to vector<16x128xf32>
    %51 = arith.addf %48, %50 : vector<16x128xf32>
    %cst_51 = arith.constant 0.000000e+00 : f32
    %52 = vector.broadcast %cst_51 : f32 to vector<16x128xf32>
    %53 = arith.maximumf %51, %52 : vector<16x128xf32>
    %c0_52 = arith.constant 0 : index
    %c0_53 = arith.constant 0 : index
    %c0_54 = arith.constant 0 : index
    %54 = vector.load %arg4[%c0_52, %c0_53, %c0_54] : memref<1x16x128xf32, #tpu.memory_space<vmem>>, vector<1x16x128xf32>
    %55 = vector.shape_cast %54 : vector<1x16x128xf32> to vector<16x128xf32>
    %56 = vector.shape_cast %53 : vector<16x128xf32> to vector<1x16x128xf32>
    tpu.vector_store %arg4[%c0_52, %c0_53, %c0_54], %56 {strides = array<i32>} : memref<1x16x128xf32, #tpu.memory_space<vmem>>, vector<1x16x128xf32>,
    return
  }
  func.func @transform_0(%arg0: i32) -> (i32, i32, i32) {
    %c0_i32 = arith.constant 0 : i32
    %c0_i32_0 = arith.constant 0 : i32
    %c0_i32_1 = arith.constant 0 : i32
    return %arg0, %c0_i32, %c0_i32_0 : i32, i32, i32
  }
  func.func @transform_1(%arg0: i32) -> (i32, i32, i32) {
    %c0_i32 = arith.constant 0 : i32
    %c0_i32_0 = arith.constant 0 : i32
    %c0_i32_1 = arith.constant 0 : i32
    %c0_i32_2 = arith.constant 0 : i32
    return %c0_i32, %c0_i32_0, %c0_i32_1 : i32, i32, i32
  }
  func.func @transform_2(%arg0: i32) -> (i32, i32) {
    %c0_i32 = arith.constant 0 : i32
    %c0_i32_0 = arith.constant 0 : i32
    %c0_i32_1 = arith.constant 0 : i32
    return %c0_i32, %c0_i32_0 : i32, i32
  }
  func.func @transform_3(%arg0: i32) -> (i32, i32, i32) {
    %c0_i32 = arith.constant 0 : i32
    %c0_i32_0 = arith.constant 0 : i32
    %c0_i32_1 = arith.constant 0 : i32
    return %arg0, %c0_i32, %c0_i32_0 : i32, i32, i32
  }
}

</mosaic_0001>

<llo_original>
// kernel: tpu_custom_call.1
$region0: #{tpu_custom_call.1}
  #allocation0 [shape = 'u32[]', space=smem, size = 0x4, offset = 0x4, fixed_abs, tag = 'smem constant byte address 0x4 - core index']
  #allocation1 [shape = 'u32[144,128]{1,0:T(1,128)}', space=vmem, size = 0x12000, scoped, tag = 'internal scratch']
  #allocation2 [shape = 'f32[30,64]{1,0:T(8,128)}', space=vmem, size = 0x4000, scoped, tag = 'scratch operand']
  %s0 = inlined_call_operand.hbm [shape: f32[2,16,64], index: 0, kind: input, shape index: {}]
  %s1 = inlined_call_operand.hbm [shape: f32[9,64,128], index: 1, kind: input, shape index: {}]
  %s2 = inlined_call_operand.vmem [shape: f32[1,128], index: 2, kind: input, shape index: {}]
  %s3 = inlined_call_operand.hbm [shape: f32[2,16,128], index: 3, kind: output, shape index: {}]
  %s4 = sld [smem:[#allocation0]]
  $region53: #{tpu_custom_call.1} parent=0
    _
  %s6 = ssub.s32 1, %s4
  %s7 = scalar_select 0, %s6, %s4
  $region1: #{tpu_custom_call.1} parent=0
    #allocation3 [shape = 'u8[16384]{0}', space=vmem, size = 0x4000, scoped, tag = 'input window, operand 0']
    #allocation4 [shape = 's32[2]{0}', space=sflag, size = 0x8, scoped, tag = 'scoped memory for tpu_custom_call.1']
    #allocation5 [shape = 's32[2]{0}', space=sflag, size = 0x8, scoped, tag = 'scoped memory for tpu_custom_call.1']
    #allocation6 [shape = 'u8[294912]{0}', space=vmem, size = 0x48000, scoped, tag = 'input window, operand 1, single buffered']
    #allocation7 [shape = 's32[1]{0}', space=sflag, size = 0x4, scoped, tag = 'scoped memory for tpu_custom_call.1']
    #allocation8 [shape = 'u8[16384]{0}', space=vmem, size = 0x4000, scoped, tag = 'output window, operand 0']
    %8 = vsyncpa [#allocation4], 0
    %s9 = scalar_lea.sflag [#allocation4], 1
    %10 = vsyncpa %s9, 0
    %11 = vsyncpa [#allocation7], 0
    %12 = vsyncpa [#allocation5], 0
    %s13 = scalar_lea.sflag [#allocation5], 1
    %14 = vsyncpa %s13, 0
    loop: start=0, step=1, limit=4
    $region2: #{tpu_custom_call.1} parent=1 // loop_pre_header
      _
    $region3: #{tpu_custom_call.1} parent=1 // loop_header
      %s16 = sphi 0, %s20
      %p17 = scmp.ge.s32.totalorder %s16, 4
      %s26 = sphi 0, %s28
      %s29 = sphi 0, %s26
      %s30 = sphi 0, %s29
      %s46 = sphi 0, %s30
      %s50 = sphi 0, %s50
      %s52 = sphi 0, %s50
      %s53 = sphi 0, %s52
      %s67 = sphi 0, %s53
      %s71 = sphi 0, %s71
      %s73 = sphi 0, %s71
      %s74 = sphi 0, %s73
      %s88 = sphi 0, %s74
      %s94 = sphi 0, %s96
      %s97 = sphi 0, %s94
      %s98 = sphi 0, %s97
      %s114 = sphi 0, %s98
    $region4: #{tpu_custom_call.1} parent=1 // loop_header_branch
      %19 = sbr.rel (%p17) target = $region8
    $region5: #{tpu_custom_call.1} parent=1 // loop_body
      %s21 = ssub.s32 %s16, 1
      %s22 = ssub.s32 %s16, 2
      %s23 = sadd.s32 %s16, 1
      %s24 = ssub.s32 %s16, %s23
      %p25 = scmp.eq.s32.totalorder %s24, 0
      %s27 = sadd.s32 %s26, 1
      %s28 = scalar_select %p25, %s26, %s27
      %p31 = pneg %p25
      %p32 = scmp.eq.s32.totalorder %s16, 1
      %p33 = por %p31, %p32
      %p34 = scmp.ne.s32.totalorder %s26, %s29
      %p35 = scmp.eq.s32.totalorder %s16, 0
      %p36 = por %p34, %p35
      %p37 = scmp.ne.s32.totalorder %s26, %s29
      %p38 = scmp.eq.s32.totalorder %s21, 1
      %p39 = por %p37, %p38
      %p40 = scmp.ne.s32.totalorder %s29, %s30
      %p41 = scmp.eq.s32.totalorder %s21, 0
      %p42 = por %p40, %p41
      %p43 = scmp.ne.s32.totalorder %s29, %s30
      %p44 = scmp.eq.s32.totalorder %s22, 1
      %p45 = por %p43, %p44
      %p47 = scmp.ne.s32.totalorder %s30, %s46
      %p48 = scmp.eq.s32.totalorder %s22, 0
      %p49 = por %p47, %p48
      %s51 = sadd.s32 %s50, 1
      %p54 = scmp.eq.s32.totalorder %s16, 1
      %p55 = scmp.ne.s32.totalorder %s50, %s52
      %p56 = scmp.eq.s32.totalorder %s16, 0
      %p57 = por %p55, %p56
      %p58 = scmp.ne.s32.totalorder %s50, %s52
      %p59 = scmp.eq.s32.totalorder %s21, 1
      %p60 = por %p58, %p59
      %p61 = scmp.ne.s32.totalorder %s52, %s53
      %p62 = scmp.eq.s32.totalorder %s21, 0
      %p63 = por %p61, %p62
      %p64 = scmp.ne.s32.totalorder %s52, %s53
      %p65 = scmp.eq.s32.totalorder %s22, 1
      %p66 = por %p64, %p65
      %p68 = scmp.ne.s32.totalorder %s53, %s67
      %p69 = scmp.eq.s32.totalorder %s22, 0
      %p70 = por %p68, %p69
      %s72 = sadd.s32 %s71, 1
      %p75 = scmp.eq.s32.totalorder %s16, 1
      %p76 = scmp.ne.s32.totalorder %s71, %s73
      %p77 = scmp.eq.s32.totalorder %s16, 0
      %p78 = por %p76, %p77
      %p79 = scmp.ne.s32.totalorder %s71, %s73
      %p80 = scmp.eq.s32.totalorder %s21, 1
      %p81 = por %p79, %p80
      %p82 = scmp.ne.s32.totalorder %s73, %s74
      %p83 = scmp.eq.s32.totalorder %s21, 0
      %p84 = por %p82, %p83
      %p85 = scmp.ne.s32.totalorder %s73, %s74
      %p86 = scmp.eq.s32.totalorder %s22, 1
      %p87 = por %p85, %p86
      %p89 = scmp.ne.s32.totalorder %s74, %s88
      %p90 = scmp.eq.s32.totalorder %s22, 0
      %p91 = por %p89, %p90
      %s92 = ssub.s32 %s16, %s23
      %p93 = scmp.eq.s32.totalorder %s92, 0
      %s95 = sadd.s32 %s94, 1
      %s96 = scalar_select %p93, %s94, %s95
      %p99 = pneg %p93
      %p100 = scmp.eq.s32.totalorder %s16, 1
      %p101 = por %p99, %p100
      %p102 = scmp.ne.s32.totalorder %s94, %s97
      %p103 = scmp.eq.s32.totalorder %s16, 0
      %p104 = por %p102, %p103
      %p105 = scmp.ne.s32.totalorder %s94, %s97
      %p106 = scmp.eq.s32.totalorder %s21, 1
      %p107 = por %p105, %p106
      %p108 = scmp.ne.s32.totalorder %s97, %s98
      %p109 = scmp.eq.s32.totalorder %s21, 0
      %p110 = por %p108, %p109
      %p111 = scmp.ne.s32.totalorder %s97, %s98
      %p112 = scmp.eq.s32.totalorder %s22, 1
      %p113 = por %p111, %p112
      %p115 = scmp.ne.s32.totalorder %s98, %s114
      %p116 = scmp.eq.s32.totalorder %s22, 0
      %p117 = por %p115, %p116
      %p118 = scmp.le.s32.totalorder 1, %s16
      %p119 = scmp.lt.s32.totalorder %s16, 3
      %p120 = pnand %p118, %p119
      %p121 = pneg %p120
      // Predicated region
      $region9: #{tpu_custom_call.1} parent=5 // pred_check
        _
      $region10: #{tpu_custom_call.1} parent=5 // pred_check_branch
        %123 = sbr.rel (%p120) target = $region12
      $region11: #{tpu_custom_call.1} parent=5 // pred_region
        %s124 = ssub.s32 %s16, 1
        // Predicated region
        $region13: #{tpu_custom_call.1} parent=11 // pred_check
          %p125 = pneg %p63
        $region14: #{tpu_custom_call.1} parent=11 // pred_check_branch
          %127 = sbr.rel (%p125) target = $region16
        $region15: #{tpu_custom_call.1} parent=11 // pred_region
          %s129 = ssub.s32 9216, 9216
          %130 = vsyncadd [#allocation7], %s129
          %s131 = sshll.u32 [#allocation6], 4
          %s132 = int_to_ptr.vmem [resolvable:$true] %s131
          %137 = dma.hbm_to_vmem [thread:$0]  %s1, 9216, %s132, [#allocation7], 128, 128, 8
        $region16: #{tpu_custom_call.1} parent=11 // pred_fallthru
          _
        // Predicated region
        $region17: #{tpu_custom_call.1} parent=11 // pred_check
          %p138 = pneg %p84
        $region18: #{tpu_custom_call.1} parent=11 // pred_check_branch
          %140 = sbr.rel (%p138) target = $region20
        $region19: #{tpu_custom_call.1} parent=11 // pred_region
          _
        $region20: #{tpu_custom_call.1} parent=11 // pred_fallthru
          _
      $region12: #{tpu_custom_call.1} parent=5 // pred_fallthru
        _
      %p141 = scmp.lt.s32.totalorder %s16, 2
      // Predicated region
      $region21: #{tpu_custom_call.1} parent=5 // pred_check
        %p142 = pneg %p141
      $region22: #{tpu_custom_call.1} parent=5 // pred_check_branch
        %144 = sbr.rel (%p142) target = $region24
      $region23: #{tpu_custom_call.1} parent=5 // pred_region
        // Predicated region
        $region25: #{tpu_custom_call.1} parent=23 // pred_check
          %p145 = pneg %p36
        $region26: #{tpu_custom_call.1} parent=23 // pred_check_branch
          %147 = sbr.rel (%p145) target = $region28
        $region27: #{tpu_custom_call.1} parent=23 // pred_region
          %s148 = sand.u32 %s26, 1
          %s149 = scalar_lea.sflag [#allocation4], %s148
          %s150 = sand.u32 %s26, 1
          %s151 = smul.addr %s150, 16
          %s152 = scalar_lea.vmem [#allocation3], %s151
          %s154 = ssub.s32 256, 256
          %155 = vsyncadd %s149, %s154
          %s156 = smul.addr %s16, 2
          %s157 = smul.addr %s156, 128
          %s158 = scalar_lea.hbm %s0, %s157
          %s159 = sshll.u32 %s152, 4
          %s160 = int_to_ptr.vmem [resolvable:$true] %s159
          %165 = dma.hbm_to_vmem [thread:$0]  %s158, 256, %s160, %s149, 128, 128, 8
        $region28: #{tpu_custom_call.1} parent=23 // pred_fallthru
          _
      $region24: #{tpu_custom_call.1} parent=5 // pred_fallthru
        _
      %p166 = scmp.le.s32.totalorder 1, %s16
      %p167 = scmp.lt.s32.totalorder %s16, 3
      %p168 = pnand %p166, %p167
      %p169 = pneg %p168
      // Predicated region
      $region29: #{tpu_custom_call.1} parent=5 // pred_check
        _
      $region30: #{tpu_custom_call.1} parent=5 // pred_check_branch
        %171 = sbr.rel (%p168) target = $region32
      $region31: #{tpu_custom_call.1} parent=5 // pred_region
        %s172 = ssub.s32 %s16, 1
        %s173 = sand.u32 %s29, 1
        %s174 = scalar_lea.sflag [#allocation4], %s173
        %s175 = sand.u32 %s29, 1
        %s176 = smul.addr %s175, 16
        %s177 = scalar_lea.vmem [#allocation3], %s176
        // Predicated region
        $region33: #{tpu_custom_call.1} parent=31 // pred_check
          %p178 = pneg %p42
        $region34: #{tpu_custom_call.1} parent=31 // pred_check_branch
          %180 = sbr.rel (%p178) target = $region36
        $region35: #{tpu_custom_call.1} parent=31 // pred_region
          %181 = dma.done %s174, 256
        $region36: #{tpu_custom_call.1} parent=31 // pred_fallthru
          _
        // Predicated region
        $region37: #{tpu_custom_call.1} parent=31 // pred_check
          %p182 = pneg %p63
        $region38: #{tpu_custom_call.1} parent=31 // pred_check_branch
          %184 = sbr.rel (%p182) target = $region40
        $region39: #{tpu_custom_call.1} parent=31 // pred_region
          %185 = dma.done [#allocation7], 9216
        $region40: #{tpu_custom_call.1} parent=31 // pred_fallthru
          _
        %s186 = sand.u32 %s29, 1
        %s187 = scalar_lea.sflag [#allocation4], %s186
        %s188 = sand.u32 %s29, 1
        %s189 = smul.addr %s188, 16
        %s190 = scalar_lea.vmem [#allocation3], %s189
        %p191 = pneg %p42
        %p192 = pneg %p39
        %p193 = pneg %p63
        %p194 = pneg %p60
        %p195 = pneg %p84
        %p196 = pneg %p81
        %p197 = pneg %p110
        %p198 = pneg %p107
        %s199 = sand.u32 %s97, 1
        %s200 = scalar_lea.sflag [#allocation5], %s199
        %s201 = sand.u32 %s97, 1
        %s202 = smul.addr %s201, 16
        %s203 = scalar_lea.vmem [#allocation8], %s202
        %vm204 = vcmask 523264
        %205 = vst.msk [vmem:[#allocation2] sm:$0xff] %vm204, 0.0
        %206 = vst.msk [vmem:[#allocation2 + $0x8] sm:$0xff] %vm204, 0.0
        %207 = vst.msk [vmem:[#allocation2 + $0x10] sm:$0xff] %vm204, 0.0
        %vm208 = vcmask 521216
        %209 = vst.msk [vmem:[#allocation2 + $0x18] sm:$0x3f] %vm208, 0.0
        %v210 = vld [vmem:[%s177] sm:$0xff]
        %v211 = vld [vmem:[%s177 + $0x8] sm:$0xff]
        %212 = vst.msk [vmem:[#allocation2 + $0x7] sm:$0xff] %vm204, %v210
        %213 = vst.msk [vmem:[#allocation2 + $0xf] sm:$0xff] %vm204, %v211
        %v214 = vld [vmem:[#allocation2] sm:$0xff]
        %v215 = vld [vmem:[#allocation2 + $0x8] sm:$0xff]
        %v216 = vld [vmem:[#allocation6] sm:$0xff]
        %v217 = vld [vmem:[#allocation6 + $0x8] sm:$0xff]
        %v218 = vld [vmem:[#allocation6 + $0x10] sm:$0xff]
        %v219 = vld [vmem:[#allocation6 + $0x18] sm:$0xff]
        %v220 = vld [vmem:[#allocation6 + $0x20] sm:$0xff]
        %v221 = vld [vmem:[#allocation6 + $0x28] sm:$0xff]
        %v222 = vld [vmem:[#allocation6 + $0x30] sm:$0xff]
        %v223 = vld [vmem:[#allocation6 + $0x38] sm:$0xff]
        %v224 = vld [vmem:[#allocation2 + $0x2] sm:$0xff]
        %v225 = vld [vmem:[#allocation2 + $0xa] sm:$0xff]
        %s226 = scalar_lea.vmem [#allocation6], 64
        %v227 = vld [vmem:[%s226] sm:$0xff]
        %v228 = vld [vmem:[%s226 + $0x8] sm:$0xff]
        %v229 = vld [vmem:[%s226 + $0x10] sm:$0xff]
        %v230 = vld [vmem:[%s226 + $0x18] sm:$0xff]
        %v231 = vld [vmem:[%s226 + $0x20] sm:$0xff]
        %v232 = vld [vmem:[%s226 + $0x28] sm:$0xff]
        %v233 = vld [vmem:[%s226 + $0x30] sm:$0xff]
        %v234 = vld [vmem:[%s226 + $0x38] sm:$0xff]
        %v236 = vsel %vm204, %v224, 0
        %v239 = vsel %vm204, %v225, 0
        %241 = vmatprep.subr.mxu0 0.0
        %242 = vmatpush1.msra.mxu0 0.0
        %243 = vmatprep.subr.mxu0 0.0
        %244 = vmatpush1.msra.mxu0 0.0
        %245 = vmatprep.subr.mxu0 0.0
        %246 = vmatpush1.msra.mxu0 0.0
        %247 = vmatprep.subr.mxu0 0.0
        %248 = vmatpush1.msra.mxu0 0.0
        %249 = vmatprep.subr.mxu0 0.0
        %250 = vmatpush1.msra.mxu0 0.0
        %251 = vmatprep.subr.mxu0 0.0
        %252 = vmatpush1.msra.mxu0 0.0
        %253 = vmatprep.subr.mxu0 0.0
        %254 = vmatpush1.msra.mxu0 0.0
        %255 = vmatprep.subr.mxu0 0.0
        %256 = vmatpush1.msra.mxu0 0.0
        %257 = vmatprep.subr.mxu0 0.0
        %258 = vmatpush1.msra.mxu0 %v234
        %259 = vmatprep.subr.mxu0 0.0
        %260 = vmatpush1.msra.mxu0 %v233
        %261 = vmatprep.subr.mxu0 0.0
        %262 = vmatpush1.msra.mxu0 %v232
        %263 = vmatprep.subr.mxu0 0.0
        %264 = vmatpush1.msra.mxu0 %v231
        %265 = vmatprep.subr.mxu0 0.0
        %266 = vmatpush1.msra.mxu0 %v230
        %267 = vmatprep.subr.mxu0 0.0
        %268 = vmatpush1.msra.mxu0 %v229
        %269 = vmatprep.subr.mxu0 0.0
        %270 = vmatpush1.msra.mxu0 %v228
        %271 = vmatprep.subr.mxu0 0.0
        %272 = vmatpush1.msra.mxu0 %v227
        %273 = vmatprep.subr.mxu0 0.0
        %274 = vmatpush2.msra.mxu0 0.0
        %275 = vmatprep.subr.mxu0 0.0
        %276 = vmatpush2.msra.mxu0 0.0
        %277 = vmatprep.subr.mxu0 0.0
        %278 = vmatpush2.msra.mxu0 0.0
        %279 = vmatprep.subr.mxu0 0.0
        %280 = vmatpush2.msra.mxu0 0.0
        %281 = vmatprep.subr.mxu0 0.0
        %282 = vmatpush2.msra.mxu0 0.0
        %283 = vmatprep.subr.mxu0 0.0
        %284 = vmatpush2.msra.mxu0 0.0
        %285 = vmatprep.subr.mxu0 0.0
        %286 = vmatpush2.msra.mxu0 0.0
        %287 = vmatprep.subr.mxu0 0.0
        %288 = vmatpush2.msra.mxu0 0.0
        %289 = vmatprep.subr.mxu0 0.0
        %290 = vmatpush2.msra.mxu0 0.0
        %291 = vmatprep.subr.mxu0 0.0
        %292 = vmatpush2.msra.mxu0 0.0
        %293 = vmatprep.subr.mxu0 0.0
        %294 = vmatpush2.msra.mxu0 0.0
        %295 = vmatprep.subr.mxu0 0.0
        %296 = vmatpush2.msra.mxu0 0.0
        %297 = vmatprep.subr.mxu0 0.0
        %298 = vmatpush2.msra.mxu0 0.0
        %299 = vmatprep.subr.mxu0 0.0
        %300 = vmatpush2.msra.mxu0 0.0
        %301 = vmatprep.subr.mxu0 0.0
        %302 = vmatpush2.msra.mxu0 0.0
        %303 = vmatprep.subr.mxu0 0.0
        %304 = vmatpush2.msra.mxu0 0.0
        %305 = vmatprep.mubr.f32.mxu0 0.0
        %306 = vmatmul.mubr.f32.gmra.mxu0 %v236
        %v307 = vpop.f32.mrf.mxu0
        %v308 = vadd.f32 0.0, %v307
        %v309 = vpop.f32.mrf.mxu0
        %310 = vmatprep.mubr.f32.mxu0 0.0
        %311 = vmatmul.mubr.f32.gmra.mxu0 %v239
        %v312 = vpop.f32.mrf.mxu0
        %v313 = vadd.f32 0.0, %v312
        %v314 = vpop.f32.mrf.mxu0
        %315 = vdwg.mxu0
        %v317 = vsel %vm204, %v214, 0
        %v320 = vsel %vm204, %v215, 0
        %322 = vmatprep.subr.mxu0 0.0
        %323 = vmatpush1.msra.mxu0 0.0
        %324 = vmatprep.subr.mxu0 0.0
        %325 = vmatpush1.msra.mxu0 0.0
        %326 = vmatprep.subr.mxu0 0.0
        %327 = vmatpush1.msra.mxu0 0.0
        %328 = vmatprep.subr.mxu0 0.0
        %329 = vmatpush1.msra.mxu0 0.0
        %330 = vmatprep.subr.mxu0 0.0
        %331 = vmatpush1.msra.mxu0 0.0
        %332 = vmatprep.subr.mxu0 0.0
        %333 = vmatpush1.msra.mxu0 0.0
        %334 = vmatprep.subr.mxu0 0.0
        %335 = vmatpush1.msra.mxu0 0.0
        %336 = vmatprep.subr.mxu0 0.0
        %337 = vmatpush1.msra.mxu0 0.0
        %338 = vmatprep.subr.mxu0 0.0
        %339 = vmatpush1.msra.mxu0 %v223
        %340 = vmatprep.subr.mxu0 0.0
        %341 = vmatpush1.msra.mxu0 %v222
        %342 = vmatprep.subr.mxu0 0.0
        %343 = vmatpush1.msra.mxu0 %v221
        %344 = vmatprep.subr.mxu0 0.0
        %345 = vmatpush1.msra.mxu0 %v220
        %346 = vmatprep.subr.mxu0 0.0
        %347 = vmatpush1.msra.mxu0 %v219
        %348 = vmatprep.subr.mxu0 0.0
        %349 = vmatpush1.msra.mxu0 %v218
        %350 = vmatprep.subr.mxu0 0.0
        %351 = vmatpush1.msra.mxu0 %v217
        %352 = vmatprep.subr.mxu0 0.0
        %353 = vmatpush1.msra.mxu0 %v216
        %354 = vmatprep.subr.mxu0 0.0
        %355 = vmatpush2.msra.mxu0 0.0
        %356 = vmatprep.subr.mxu0 0.0
        %357 = vmatpush2.msra.mxu0 0.0
        %358 = vmatprep.subr.mxu0 0.0
        %359 = vmatpush2.msra.mxu0 0.0
        %360 = vmatprep.subr.mxu0 0.0
        %361 = vmatpush2.msra.mxu0 0.0
        %362 = vmatprep.subr.mxu0 0.0
        %363 = vmatpush2.msra.mxu0 0.0
        %364 = vmatprep.subr.mxu0 0.0
        %365 = vmatpush2.msra.mxu0 0.0
        %366 = vmatprep.subr.mxu0 0.0
        %367 = vmatpush2.msra.mxu0 0.0
        %368 = vmatprep.subr.mxu0 0.0
        %369 = vmatpush2.msra.mxu0 0.0
        %370 = vmatprep.subr.mxu0 0.0
        %371 = vmatpush2.msra.mxu0 0.0
        %372 = vmatprep.subr.mxu0 0.0
        %373 = vmatpush2.msra.mxu0 0.0
        %374 = vmatprep.subr.mxu0 0.0
        %375 = vmatpush2.msra.mxu0 0.0
        %376 = vmatprep.subr.mxu0 0.0
        %377 = vmatpush2.msra.mxu0 0.0
        %378 = vmatprep.subr.mxu0 0.0
        %379 = vmatpush2.msra.mxu0 0.0
        %380 = vmatprep.subr.mxu0 0.0
        %381 = vmatpush2.msra.mxu0 0.0
        %382 = vmatprep.subr.mxu0 0.0
        %383 = vmatpush2.msra.mxu0 0.0
        %384 = vmatprep.subr.mxu0 0.0
        %385 = vmatpush2.msra.mxu0 0.0
        %386 = vmatprep.mubr.f32.mxu0 0.0
        %387 = vmatmul.mubr.f32.gmra.mxu0 %v317
        %v388 = vpop.f32.mrf.mxu0
        %v389 = vadd.f32 %v308, %v388
        %v390 = vpop.f32.mrf.mxu0
        %391 = vmatprep.mubr.f32.mxu0 0.0
        %392 = vmatmul.mubr.f32.gmra.mxu0 %v320
        %v393 = vpop.f32.mrf.mxu0
        %v394 = vadd.f32 %v313, %v393
        %v395 = vpop.f32.mrf.mxu0
        %396 = vdwg.mxu0
        %v397 = vld [vmem:[#allocation2 + $0x4] sm:$0xff]
        %v398 = vld [vmem:[#allocation2 + $0xc] sm:$0xff]
        %s399 = scalar_lea.vmem [#allocation6], 128
        %v400 = vld [vmem:[%s399] sm:$0xff]
        %v401 = vld [vmem:[%s399 + $0x8] sm:$0xff]
        %v402 = vld [vmem:[%s399 + $0x10] sm:$0xff]
        %v403 = vld [vmem:[%s399 + $0x18] sm:$0xff]
        %v404 = vld [vmem:[%s399 + $0x20] sm:$0xff]
        %v405 = vld [vmem:[%s399 + $0x28] sm:$0xff]
        %v406 = vld [vmem:[%s399 + $0x30] sm:$0xff]
        %v407 = vld [vmem:[%s399 + $0x38] sm:$0xff]
        %v409 = vsel %vm204, %v397, 0
        %v412 = vsel %vm204, %v398, 0
        %414 = vmatprep.subr.mxu0 0.0
        %415 = vmatpush1.msra.mxu0 0.0
        %416 = vmatprep.subr.mxu0 0.0
        %417 = vmatpush1.msra.mxu0 0.0
        %418 = vmatprep.subr.mxu0 0.0
        %419 = vmatpush1.msra.mxu0 0.0
        %420 = vmatprep.subr.mxu0 0.0
        %421 = vmatpush1.msra.mxu0 0.0
        %422 = vmatprep.subr.mxu0 0.0
        %423 = vmatpush1.msra.mxu0 0.0
        %424 = vmatprep.subr.mxu0 0.0
        %425 = vmatpush1.msra.mxu0 0.0
        %426 = vmatprep.subr.mxu0 0.0
        %427 = vmatpush1.msra.mxu0 0.0
        %428 = vmatprep.subr.mxu0 0.0
        %429 = vmatpush1.msra.mxu0 0.0
        %430 = vmatprep.subr.mxu0 0.0
        %431 = vmatpush1.msra.mxu0 %v407
        %432 = vmatprep.subr.mxu0 0.0
        %433 = vmatpush1.msra.mxu0 %v406
        %434 = vmatprep.subr.mxu0 0.0
        %435 = vmatpush1.msra.mxu0 %v405
        %436 = vmatprep.subr.mxu0 0.0
        %437 = vmatpush1.msra.mxu0 %v404
        %438 = vmatprep.subr.mxu0 0.0
        %439 = vmatpush1.msra.mxu0 %v403
        %440 = vmatprep.subr.mxu0 0.0
        %441 = vmatpush1.msra.mxu0 %v402
        %442 = vmatprep.subr.mxu0 0.0
        %443 = vmatpush1.msra.mxu0 %v401
        %444 = vmatprep.subr.mxu0 0.0
        %445 = vmatpush1.msra.mxu0 %v400
        %446 = vmatprep.subr.mxu0 0.0
        %447 = vmatpush2.msra.mxu0 0.0
        %448 = vmatprep.subr.mxu0 0.0
        %449 = vmatpush2.msra.mxu0 0.0
        %450 = vmatprep.subr.mxu0 0.0
        %451 = vmatpush2.msra.mxu0 0.0
        %452 = vmatprep.subr.mxu0 0.0
        %453 = vmatpush2.msra.mxu0 0.0
        %454 = vmatprep.subr.mxu0 0.0
        %455 = vmatpush2.msra.mxu0 0.0
        %456 = vmatprep.subr.mxu0 0.0
        %457 = vmatpush2.msra.mxu0 0.0
        %458 = vmatprep.subr.mxu0 0.0
        %459 = vmatpush2.msra.mxu0 0.0
        %460 = vmatprep.subr.mxu0 0.0
        %461 = vmatpush2.msra.mxu0 0.0
        %462 = vmatprep.subr.mxu0 0.0
        %463 = vmatpush2.msra.mxu0 0.0
        %464 = vmatprep.subr.mxu0 0.0
        %465 = vmatpush2.msra.mxu0 0.0
        %466 = vmatprep.subr.mxu0 0.0
        %467 = vmatpush2.msra.mxu0 0.0
        %468 = vmatprep.subr.mxu0 0.0
        %469 = vmatpush2.msra.mxu0 0.0
        %470 = vmatprep.subr.mxu0 0.0
        %471 = vmatpush2.msra.mxu0 0.0
        %472 = vmatprep.subr.mxu0 0.0
        %473 = vmatpush2.msra.mxu0 0.0
        %474 = vmatprep.subr.mxu0 0.0
        %475 = vmatpush2.msra.mxu0 0.0
        %476 = vmatprep.subr.mxu0 0.0
        %477 = vmatpush2.msra.mxu0 0.0
        %478 = vmatprep.mubr.f32.mxu0 0.0
        %479 = vmatmul.mubr.f32.gmra.mxu0 %v409
        %v480 = vpop.f32.mrf.mxu0
        %v481 = vadd.f32 0.0, %v480
        %v482 = vpop.f32.mrf.mxu0
        %483 = vmatprep.mubr.f32.mxu0 0.0
        %484 = vmatmul.mubr.f32.gmra.mxu0 %v412
        %v485 = vpop.f32.mrf.mxu0
        %v486 = vadd.f32 0.0, %v485
        %v487 = vpop.f32.mrf.mxu0
        %488 = vdwg.mxu0
        %v489 = vadd.f32 %v389, %v481
        %v490 = vadd.f32 %v394, %v486
        %v491 = vld [vmem:[#allocation2 + $0x6] sm:$0xff]
        %v492 = vld [vmem:[#allocation2 + $0xe] sm:$0xff]
        %s493 = scalar_lea.vmem [#allocation6], 192
        %v494 = vld [vmem:[%s493] sm:$0xff]
        %v495 = vld [vmem:[%s493 + $0x8] sm:$0xff]
        %v496 = vld [vmem:[%s493 + $0x10] sm:$0xff]
        %v497 = vld [vmem:[%s493 + $0x18] sm:$0xff]
        %v498 = vld [vmem:[%s493 + $0x20] sm:$0xff]
        %v499 = vld [vmem:[%s493 + $0x28] sm:$0xff]
        %v500 = vld [vmem:[%s493 + $0x30] sm:$0xff]
        %v501 = vld [vmem:[%s493 + $0x38] sm:$0xff]
        %v503 = vsel %vm204, %v491, 0
        %v506 = vsel %vm204, %v492, 0
        %508 = vmatprep.subr.mxu0 0.0
        %509 = vmatpush1.msra.mxu0 0.0
        %510 = vmatprep.subr.mxu0 0.0
        %511 = vmatpush1.msra.mxu0 0.0
        %512 = vmatprep.subr.mxu0 0.0
        %513 = vmatpush1.msra.mxu0 0.0
        %514 = vmatprep.subr.mxu0 0.0
        %515 = vmatpush1.msra.mxu0 0.0
        %516 = vmatprep.subr.mxu0 0.0
        %517 = vmatpush1.msra.mxu0 0.0
        %518 = vmatprep.subr.mxu0 0.0
        %519 = vmatpush1.msra.mxu0 0.0
        %520 = vmatprep.subr.mxu0 0.0
        %521 = vmatpush1.msra.mxu0 0.0
        %522 = vmatprep.subr.mxu0 0.0
        %523 = vmatpush1.msra.mxu0 0.0
        %524 = vmatprep.subr.mxu0 0.0
        %525 = vmatpush1.msra.mxu0 %v501
        %526 = vmatprep.subr.mxu0 0.0
        %527 = vmatpush1.msra.mxu0 %v500
        %528 = vmatprep.subr.mxu0 0.0
        %529 = vmatpush1.msra.mxu0 %v499
        %530 = vmatprep.subr.mxu0 0.0
        %531 = vmatpush1.msra.mxu0 %v498
        %532 = vmatprep.subr.mxu0 0.0
        %533 = vmatpush1.msra.mxu0 %v497
        %534 = vmatprep.subr.mxu0 0.0
        %535 = vmatpush1.msra.mxu0 %v496
        %536 = vmatprep.subr.mxu0 0.0
        %537 = vmatpush1.msra.mxu0 %v495
        %538 = vmatprep.subr.mxu0 0.0
        %539 = vmatpush1.msra.mxu0 %v494
        %540 = vmatprep.subr.mxu0 0.0
        %541 = vmatpush2.msra.mxu0 0.0
        %542 = vmatprep.subr.mxu0 0.0
        %543 = vmatpush2.msra.mxu0 0.0
        %544 = vmatprep.subr.mxu0 0.0
        %545 = vmatpush2.msra.mxu0 0.0
        %546 = vmatprep.subr.mxu0 0.0
        %547 = vmatpush2.msra.mxu0 0.0
        %548 = vmatprep.subr.mxu0 0.0
        %549 = vmatpush2.msra.mxu0 0.0
        %550 = vmatprep.subr.mxu0 0.0
        %551 = vmatpush2.msra.mxu0 0.0
        %552 = vmatprep.subr.mxu0 0.0
        %553 = vmatpush2.msra.mxu0 0.0
        %554 = vmatprep.subr.mxu0 0.0
        %555 = vmatpush2.msra.mxu0 0.0
        %556 = vmatprep.subr.mxu0 0.0
        %557 = vmatpush2.msra.mxu0 0.0
        %558 = vmatprep.subr.mxu0 0.0
        %559 = vmatpush2.msra.mxu0 0.0
        %560 = vmatprep.subr.mxu0 0.0
        %561 = vmatpush2.msra.mxu0 0.0
        %562 = vmatprep.subr.mxu0 0.0
        %563 = vmatpush2.msra.mxu0 0.0
        %564 = vmatprep.subr.mxu0 0.0
        %565 = vmatpush2.msra.mxu0 0.0
        %566 = vmatprep.subr.mxu0 0.0
        %567 = vmatpush2.msra.mxu0 0.0
        %568 = vmatprep.subr.mxu0 0.0
        %569 = vmatpush2.msra.mxu0 0.0
        %570 = vmatprep.subr.mxu0 0.0
        %571 = vmatpush2.msra.mxu0 0.0
        %572 = vmatprep.mubr.f32.mxu0 0.0
        %573 = vmatmul.mubr.f32.gmra.mxu0 %v503
        %v574 = vpop.f32.mrf.mxu0
        %v575 = vadd.f32 0.0, %v574
        %v576 = vpop.f32.mrf.mxu0
        %577 = vmatprep.mubr.f32.mxu0 0.0
        %578 = vmatmul.mubr.f32.gmra.mxu0 %v506
        %v579 = vpop.f32.mrf.mxu0
        %v580 = vadd.f32 0.0, %v579
        %v581 = vpop.f32.mrf.mxu0
        %582 = vdwg.mxu0
        %v583 = vadd.f32 %v489, %v575
        %v584 = vadd.f32 %v490, %v580
        %v585 = vld [vmem:[#allocation2 + $0x7] sm:$0xff]
        %v586 = vld [vmem:[#allocation2 + $0xf] sm:$0xff]
        %s587 = scalar_lea.vmem [#allocation6], 256
        %v588 = vld [vmem:[%s587] sm:$0xff]
        %v589 = vld [vmem:[%s587 + $0x8] sm:$0xff]
        %v590 = vld [vmem:[%s587 + $0x10] sm:$0xff]
        %v591 = vld [vmem:[%s587 + $0x18] sm:$0xff]
        %v592 = vld [vmem:[%s587 + $0x20] sm:$0xff]
        %v593 = vld [vmem:[%s587 + $0x28] sm:$0xff]
        %v594 = vld [vmem:[%s587 + $0x30] sm:$0xff]
        %v595 = vld [vmem:[%s587 + $0x38] sm:$0xff]
        %v597 = vsel %vm204, %v585, 0
        %v600 = vsel %vm204, %v586, 0
        %602 = vmatprep.subr.mxu0 0.0
        %603 = vmatpush1.msra.mxu0 0.0
        %604 = vmatprep.subr.mxu0 0.0
        %605 = vmatpush1.msra.mxu0 0.0
        %606 = vmatprep.subr.mxu0 0.0
        %607 = vmatpush1.msra.mxu0 0.0
        %608 = vmatprep.subr.mxu0 0.0
        %609 = vmatpush1.msra.mxu0 0.0
        %610 = vmatprep.subr.mxu0 0.0
        %611 = vmatpush1.msra.mxu0 0.0
        %612 = vmatprep.subr.mxu0 0.0
        %613 = vmatpush1.msra.mxu0 0.0
        %614 = vmatprep.subr.mxu0 0.0
        %615 = vmatpush1.msra.mxu0 0.0
        %616 = vmatprep.subr.mxu0 0.0
        %617 = vmatpush1.msra.mxu0 0.0
        %618 = vmatprep.subr.mxu0 0.0
        %619 = vmatpush1.msra.mxu0 %v595
        %620 = vmatprep.subr.mxu0 0.0
        %621 = vmatpush1.msra.mxu0 %v594
        %622 = vmatprep.subr.mxu0 0.0
        %623 = vmatpush1.msra.mxu0 %v593
        %624 = vmatprep.subr.mxu0 0.0
        %625 = vmatpush1.msra.mxu0 %v592
        %626 = vmatprep.subr.mxu0 0.0
        %627 = vmatpush1.msra.mxu0 %v591
        %628 = vmatprep.subr.mxu0 0.0
        %629 = vmatpush1.msra.mxu0 %v590
        %630 = vmatprep.subr.mxu0 0.0
        %631 = vmatpush1.msra.mxu0 %v589
        %632 = vmatprep.subr.mxu0 0.0
        %633 = vmatpush1.msra.mxu0 %v588
        %634 = vmatprep.subr.mxu0 0.0
        %635 = vmatpush2.msra.mxu0 0.0
        %636 = vmatprep.subr.mxu0 0.0
        %637 = vmatpush2.msra.mxu0 0.0
        %638 = vmatprep.subr.mxu0 0.0
        %639 = vmatpush2.msra.mxu0 0.0
        %640 = vmatprep.subr.mxu0 0.0
        %641 = vmatpush2.msra.mxu0 0.0
        %642 = vmatprep.subr.mxu0 0.0
        %643 = vmatpush2.msra.mxu0 0.0
        %644 = vmatprep.subr.mxu0 0.0
        %645 = vmatpush2.msra.mxu0 0.0
        %646 = vmatprep.subr.mxu0 0.0
        %647 = vmatpush2.msra.mxu0 0.0
        %648 = vmatprep.subr.mxu0 0.0
        %649 = vmatpush2.msra.mxu0 0.0
        %650 = vmatprep.subr.mxu0 0.0
        %651 = vmatpush2.msra.mxu0 0.0
        %652 = vmatprep.subr.mxu0 0.0
        %653 = vmatpush2.msra.mxu0 0.0
        %654 = vmatprep.subr.mxu0 0.0
        %655 = vmatpush2.msra.mxu0 0.0
        %656 = vmatprep.subr.mxu0 0.0
        %657 = vmatpush2.msra.mxu0 0.0
        %658 = vmatprep.subr.mxu0 0.0
        %659 = vmatpush2.msra.mxu0 0.0
        %660 = vmatprep.subr.mxu0 0.0
        %661 = vmatpush2.msra.mxu0 0.0
        %662 = vmatprep.subr.mxu0 0.0
        %663 = vmatpush2.msra.mxu0 0.0
        %664 = vmatprep.subr.mxu0 0.0
        %665 = vmatpush2.msra.mxu0 0.0
        %666 = vmatprep.mubr.f32.mxu0 0.0
        %667 = vmatmul.mubr.f32.gmra.mxu0 %v597
        %v668 = vpop.f32.mrf.mxu0
        %v669 = vadd.f32 0.0, %v668
        %v670 = vpop.f32.mrf.mxu0
        %671 = vmatprep.mubr.f32.mxu0 0.0
        %672 = vmatmul.mubr.f32.gmra.mxu0 %v600
        %v673 = vpop.f32.mrf.mxu0
        %v674 = vadd.f32 0.0, %v673
        %v675 = vpop.f32.mrf.mxu0
        %676 = vdwg.mxu0
        %v677 = vadd.f32 %v583, %v669
        %v678 = vadd.f32 %v584, %v674
        %v679 = vld [vmem:[#allocation2 + $0x8] sm:$0xff]
        %v680 = vld [vmem:[#allocation2 + $0x10] sm:$0xff]
        %s681 = scalar_lea.vmem [#allocation6], 320
        %v682 = vld [vmem:[%s681] sm:$0xff]
        %v683 = vld [vmem:[%s681 + $0x8] sm:$0xff]
        %v684 = vld [vmem:[%s681 + $0x10] sm:$0xff]
        %v685 = vld [vmem:[%s681 + $0x18] sm:$0xff]
        %v686 = vld [vmem:[%s681 + $0x20] sm:$0xff]
        %v687 = vld [vmem:[%s681 + $0x28] sm:$0xff]
        %v688 = vld [vmem:[%s681 + $0x30] sm:$0xff]
        %v689 = vld [vmem:[%s681 + $0x38] sm:$0xff]
        %v691 = vsel %vm204, %v679, 0
        %v694 = vsel %vm204, %v680, 0
        %696 = vmatprep.subr.mxu0 0.0
        %697 = vmatpush1.msra.mxu0 0.0
        %698 = vmatprep.subr.mxu0 0.0
        %699 = vmatpush1.msra.mxu0 0.0
        %700 = vmatprep.subr.mxu0 0.0
        %701 = vmatpush1.msra.mxu0 0.0
        %702 = vmatprep.subr.mxu0 0.0
        %703 = vmatpush1.msra.mxu0 0.0
        %704 = vmatprep.subr.mxu0 0.0
        %705 = vmatpush1.msra.mxu0 0.0
        %706 = vmatprep.subr.mxu0 0.0
        %707 = vmatpush1.msra.mxu0 0.0
        %708 = vmatprep.subr.mxu0 0.0
        %709 = vmatpush1.msra.mxu0 0.0
        %710 = vmatprep.subr.mxu0 0.0
        %711 = vmatpush1.msra.mxu0 0.0
        %712 = vmatprep.subr.mxu0 0.0
        %713 = vmatpush1.msra.mxu0 %v689
        %714 = vmatprep.subr.mxu0 0.0
        %715 = vmatpush1.msra.mxu0 %v688
        %716 = vmatprep.subr.mxu0 0.0
        %717 = vmatpush1.msra.mxu0 %v687
        %718 = vmatprep.subr.mxu0 0.0
        %719 = vmatpush1.msra.mxu0 %v686
        %720 = vmatprep.subr.mxu0 0.0
        %721 = vmatpush1.msra.mxu0 %v685
        %722 = vmatprep.subr.mxu0 0.0
        %723 = vmatpush1.msra.mxu0 %v684
        %724 = vmatprep.subr.mxu0 0.0
        %725 = vmatpush1.msra.mxu0 %v683
        %726 = vmatprep.subr.mxu0 0.0
        %727 = vmatpush1.msra.mxu0 %v682
        %728 = vmatprep.subr.mxu0 0.0
        %729 = vmatpush2.msra.mxu0 0.0
        %730 = vmatprep.subr.mxu0 0.0
        %731 = vmatpush2.msra.mxu0 0.0
        %732 = vmatprep.subr.mxu0 0.0
        %733 = vmatpush2.msra.mxu0 0.0
        %734 = vmatprep.subr.mxu0 0.0
        %735 = vmatpush2.msra.mxu0 0.0
        %736 = vmatprep.subr.mxu0 0.0
        %737 = vmatpush2.msra.mxu0 0.0
        %738 = vmatprep.subr.mxu0 0.0
        %739 = vmatpush2.msra.mxu0 0.0
        %740 = vmatprep.subr.mxu0 0.0
        %741 = vmatpush2.msra.mxu0 0.0
        %742 = vmatprep.subr.mxu0 0.0
        %743 = vmatpush2.msra.mxu0 0.0
        %744 = vmatprep.subr.mxu0 0.0
        %745 = vmatpush2.msra.mxu0 0.0
        %746 = vmatprep.subr.mxu0 0.0
        %747 = vmatpush2.msra.mxu0 0.0
        %748 = vmatprep.subr.mxu0 0.0
        %749 = vmatpush2.msra.mxu0 0.0
        %750 = vmatprep.subr.mxu0 0.0
        %751 = vmatpush2.msra.mxu0 0.0
        %752 = vmatprep.subr.mxu0 0.0
        %753 = vmatpush2.msra.mxu0 0.0
        %754 = vmatprep.subr.mxu0 0.0
        %755 = vmatpush2.msra.mxu0 0.0
        %756 = vmatprep.subr.mxu0 0.0
        %757 = vmatpush2.msra.mxu0 0.0
        %758 = vmatprep.subr.mxu0 0.0
        %759 = vmatpush2.msra.mxu0 0.0
        %760 = vmatprep.mubr.f32.mxu0 0.0
        %761 = vmatmul.mubr.f32.gmra.mxu0 %v691
        %v762 = vpop.f32.mrf.mxu0
        %v763 = vadd.f32 0.0, %v762
        %v764 = vpop.f32.mrf.mxu0
        %765 = vmatprep.mubr.f32.mxu0 0.0
        %766 = vmatmul.mubr.f32.gmra.mxu0 %v694
        %v767 = vpop.f32.mrf.mxu0
        %v768 = vadd.f32 0.0, %v767
        %v769 = vpop.f32.mrf.mxu0
        %770 = vdwg.mxu0
        %v771 = vadd.f32 %v677, %v763
        %v772 = vadd.f32 %v678, %v768
        %v773 = vld [vmem:[#allocation2 + $0xa] sm:$0xff]
        %v774 = vld [vmem:[#allocation2 + $0x12] sm:$0xff]
        %s775 = scalar_lea.vmem [#allocation6], 384
        %v776 = vld [vmem:[%s775] sm:$0xff]
        %v777 = vld [vmem:[%s775 + $0x8] sm:$0xff]
        %v778 = vld [vmem:[%s775 + $0x10] sm:$0xff]
        %v779 = vld [vmem:[%s775 + $0x18] sm:$0xff]
        %v780 = vld [vmem:[%s775 + $0x20] sm:$0xff]
        %v781 = vld [vmem:[%s775 + $0x28] sm:$0xff]
        %v782 = vld [vmem:[%s775 + $0x30] sm:$0xff]
        %v783 = vld [vmem:[%s775 + $0x38] sm:$0xff]
        %v785 = vsel %vm204, %v773, 0
        %v788 = vsel %vm204, %v774, 0
        %790 = vmatprep.subr.mxu0 0.0
        %791 = vmatpush1.msra.mxu0 0.0
        %792 = vmatprep.subr.mxu0 0.0
        %793 = vmatpush1.msra.mxu0 0.0
        %794 = vmatprep.subr.mxu0 0.0
        %795 = vmatpush1.msra.mxu0 0.0
        %796 = vmatprep.subr.mxu0 0.0
        %797 = vmatpush1.msra.mxu0 0.0
        %798 = vmatprep.subr.mxu0 0.0
        %799 = vmatpush1.msra.mxu0 0.0
        %800 = vmatprep.subr.mxu0 0.0
        %801 = vmatpush1.msra.mxu0 0.0
        %802 = vmatprep.subr.mxu0 0.0
        %803 = vmatpush1.msra.mxu0 0.0
        %804 = vmatprep.subr.mxu0 0.0
        %805 = vmatpush1.msra.mxu0 0.0
        %806 = vmatprep.subr.mxu0 0.0
        %807 = vmatpush1.msra.mxu0 %v783
        %808 = vmatprep.subr.mxu0 0.0
        %809 = vmatpush1.msra.mxu0 %v782
        %810 = vmatprep.subr.mxu0 0.0
        %811 = vmatpush1.msra.mxu0 %v781
        %812 = vmatprep.subr.mxu0 0.0
        %813 = vmatpush1.msra.mxu0 %v780
        %814 = vmatprep.subr.mxu0 0.0
        %815 = vmatpush1.msra.mxu0 %v779
        %816 = vmatprep.subr.mxu0 0.0
        %817 = vmatpush1.msra.mxu0 %v778
        %818 = vmatprep.subr.mxu0 0.0
        %819 = vmatpush1.msra.mxu0 %v777
        %820 = vmatprep.subr.mxu0 0.0
        %821 = vmatpush1.msra.mxu0 %v776
        %822 = vmatprep.subr.mxu0 0.0
        %823 = vmatpush2.msra.mxu0 0.0
        %824 = vmatprep.subr.mxu0 0.0
        %825 = vmatpush2.msra.mxu0 0.0
        %826 = vmatprep.subr.mxu0 0.0
        %827 = vmatpush2.msra.mxu0 0.0
        %828 = vmatprep.subr.mxu0 0.0
        %829 = vmatpush2.msra.mxu0 0.0
        %830 = vmatprep.subr.mxu0 0.0
        %831 = vmatpush2.msra.mxu0 0.0
        %832 = vmatprep.subr.mxu0 0.0
        %833 = vmatpush2.msra.mxu0 0.0
        %834 = vmatprep.subr.mxu0 0.0
        %835 = vmatpush2.msra.mxu0 0.0
        %836 = vmatprep.subr.mxu0 0.0
        %837 = vmatpush2.msra.mxu0 0.0
        %838 = vmatprep.subr.mxu0 0.0
        %839 = vmatpush2.msra.mxu0 0.0
        %840 = vmatprep.subr.mxu0 0.0
        %841 = vmatpush2.msra.mxu0 0.0
        %842 = vmatprep.subr.mxu0 0.0
        %843 = vmatpush2.msra.mxu0 0.0
        %844 = vmatprep.subr.mxu0 0.0
        %845 = vmatpush2.msra.mxu0 0.0
        %846 = vmatprep.subr.mxu0 0.0
        %847 = vmatpush2.msra.mxu0 0.0
        %848 = vmatprep.subr.mxu0 0.0
        %849 = vmatpush2.msra.mxu0 0.0
        %850 = vmatprep.subr.mxu0 0.0
        %851 = vmatpush2.msra.mxu0 0.0
        %852 = vmatprep.subr.mxu0 0.0
        %853 = vmatpush2.msra.mxu0 0.0
        %854 = vmatprep.mubr.f32.mxu0 0.0
        %855 = vmatmul.mubr.f32.gmra.mxu0 %v785
        %v856 = vpop.f32.mrf.mxu0
        %v857 = vadd.f32 0.0, %v856
        %v858 = vpop.f32.mrf.mxu0
        %859 = vmatprep.mubr.f32.mxu0 0.0
        %860 = vmatmul.mubr.f32.gmra.mxu0 %v788
        %v861 = vpop.f32.mrf.mxu0
        %v862 = vadd.f32 0.0, %v861
        %v863 = vpop.f32.mrf.mxu0
        %864 = vdwg.mxu0
        %v865 = vadd.f32 %v771, %v857
        %v866 = vadd.f32 %v772, %v862
        %v867 = vld [vmem:[#allocation2 + $0xc] sm:$0xff]
        %v868 = vld [vmem:[#allocation2 + $0x14] sm:$0xff]
        %s869 = scalar_lea.vmem [#allocation6], 448
        %v870 = vld [vmem:[%s869] sm:$0xff]
        %v871 = vld [vmem:[%s869 + $0x8] sm:$0xff]
        %v872 = vld [vmem:[%s869 + $0x10] sm:$0xff]
        %v873 = vld [vmem:[%s869 + $0x18] sm:$0xff]
        %v874 = vld [vmem:[%s869 + $0x20] sm:$0xff]
        %v875 = vld [vmem:[%s869 + $0x28] sm:$0xff]
        %v876 = vld [vmem:[%s869 + $0x30] sm:$0xff]
        %v877 = vld [vmem:[%s869 + $0x38] sm:$0xff]
        %v879 = vsel %vm204, %v867, 0
        %v882 = vsel %vm204, %v868, 0
        %884 = vmatprep.subr.mxu0 0.0
        %885 = vmatpush1.msra.mxu0 0.0
        %886 = vmatprep.subr.mxu0 0.0
        %887 = vmatpush1.msra.mxu0 0.0
        %888 = vmatprep.subr.mxu0 0.0
        %889 = vmatpush1.msra.mxu0 0.0
        %890 = vmatprep.subr.mxu0 0.0
        %891 = vmatpush1.msra.mxu0 0.0
        %892 = vmatprep.subr.mxu0 0.0
        %893 = vmatpush1.msra.mxu0 0.0
        %894 = vmatprep.subr.mxu0 0.0
        %895 = vmatpush1.msra.mxu0 0.0
        %896 = vmatprep.subr.mxu0 0.0
        %897 = vmatpush1.msra.mxu0 0.0
        %898 = vmatprep.subr.mxu0 0.0
        %899 = vmatpush1.msra.mxu0 0.0
        %900 = vmatprep.subr.mxu0 0.0
        %901 = vmatpush1.msra.mxu0 %v877
        %902 = vmatprep.subr.mxu0 0.0
        %903 = vmatpush1.msra.mxu0 %v876
        %904 = vmatprep.subr.mxu0 0.0
        %905 = vmatpush1.msra.mxu0 %v875
        %906 = vmatprep.subr.mxu0 0.0
        %907 = vmatpush1.msra.mxu0 %v874
        %908 = vmatprep.subr.mxu0 0.0
        %909 = vmatpush1.msra.mxu0 %v873
        %910 = vmatprep.subr.mxu0 0.0
        %911 = vmatpush1.msra.mxu0 %v872
        %912 = vmatprep.subr.mxu0 0.0
        %913 = vmatpush1.msra.mxu0 %v871
        %914 = vmatprep.subr.mxu0 0.0
        %915 = vmatpush1.msra.mxu0 %v870
        %916 = vmatprep.subr.mxu0 0.0
        %917 = vmatpush2.msra.mxu0 0.0
        %918 = vmatprep.subr.mxu0 0.0
        %919 = vmatpush2.msra.mxu0 0.0
        %920 = vmatprep.subr.mxu0 0.0
        %921 = vmatpush2.msra.mxu0 0.0
        %922 = vmatprep.subr.mxu0 0.0
        %923 = vmatpush2.msra.mxu0 0.0
        %924 = vmatprep.subr.mxu0 0.0
        %925 = vmatpush2.msra.mxu0 0.0
        %926 = vmatprep.subr.mxu0 0.0
        %927 = vmatpush2.msra.mxu0 0.0
        %928 = vmatprep.subr.mxu0 0.0
        %929 = vmatpush2.msra.mxu0 0.0
        %930 = vmatprep.subr.mxu0 0.0
        %931 = vmatpush2.msra.mxu0 0.0
        %932 = vmatprep.subr.mxu0 0.0
        %933 = vmatpush2.msra.mxu0 0.0
        %934 = vmatprep.subr.mxu0 0.0
        %935 = vmatpush2.msra.mxu0 0.0
        %936 = vmatprep.subr.mxu0 0.0
        %937 = vmatpush2.msra.mxu0 0.0
        %938 = vmatprep.subr.mxu0 0.0
        %939 = vmatpush2.msra.mxu0 0.0
        %940 = vmatprep.subr.mxu0 0.0
        %941 = vmatpush2.msra.mxu0 0.0
        %942 = vmatprep.subr.mxu0 0.0
        %943 = vmatpush2.msra.mxu0 0.0
        %944 = vmatprep.subr.mxu0 0.0
        %945 = vmatpush2.msra.mxu0 0.0
        %946 = vmatprep.subr.mxu0 0.0
        %947 = vmatpush2.msra.mxu0 0.0
        %948 = vmatprep.mubr.f32.mxu0 0.0
        %949 = vmatmul.mubr.f32.gmra.mxu0 %v879
        %v950 = vpop.f32.mrf.mxu0
        %v951 = vadd.f32 0.0, %v950
        %v952 = vpop.f32.mrf.mxu0
        %953 = vmatprep.mubr.f32.mxu0 0.0
        %954 = vmatmul.mubr.f32.gmra.mxu0 %v882
        %v955 = vpop.f32.mrf.mxu0
        %v956 = vadd.f32 0.0, %v955
        %v957 = vpop.f32.mrf.mxu0
        %958 = vdwg.mxu0
        %v959 = vadd.f32 %v865, %v951
        %v960 = vadd.f32 %v866, %v956
        %v961 = vld [vmem:[#allocation2 + $0xe] sm:$0xff]
        %v962 = vld [vmem:[#allocation2 + $0x16] sm:$0xff]
        %s963 = scalar_lea.vmem [#allocation6], 512
        %v964 = vld [vmem:[%s963] sm:$0xff]
        %v965 = vld [vmem:[%s963 + $0x8] sm:$0xff]
        %v966 = vld [vmem:[%s963 + $0x10] sm:$0xff]
        %v967 = vld [vmem:[%s963 + $0x18] sm:$0xff]
        %v968 = vld [vmem:[%s963 + $0x20] sm:$0xff]
        %v969 = vld [vmem:[%s963 + $0x28] sm:$0xff]
        %v970 = vld [vmem:[%s963 + $0x30] sm:$0xff]
        %v971 = vld [vmem:[%s963 + $0x38] sm:$0xff]
        %v973 = vsel %vm204, %v961, 0
        %v976 = vsel %vm204, %v962, 0
        %978 = vmatprep.subr.mxu0 0.0
        %979 = vmatpush1.msra.mxu0 0.0
        %980 = vmatprep.subr.mxu0 0.0
        %981 = vmatpush1.msra.mxu0 0.0
        %982 = vmatprep.subr.mxu0 0.0
        %983 = vmatpush1.msra.mxu0 0.0
        %984 = vmatprep.subr.mxu0 0.0
        %985 = vmatpush1.msra.mxu0 0.0
        %986 = vmatprep.subr.mxu0 0.0
        %987 = vmatpush1.msra.mxu0 0.0
        %988 = vmatprep.subr.mxu0 0.0
        %989 = vmatpush1.msra.mxu0 0.0
        %990 = vmatprep.subr.mxu0 0.0
        %991 = vmatpush1.msra.mxu0 0.0
        %992 = vmatprep.subr.mxu0 0.0
        %993 = vmatpush1.msra.mxu0 0.0
        %994 = vmatprep.subr.mxu0 0.0
        %995 = vmatpush1.msra.mxu0 %v971
        %996 = vmatprep.subr.mxu0 0.0
        %997 = vmatpush1.msra.mxu0 %v970
        %998 = vmatprep.subr.mxu0 0.0
        %999 = vmatpush1.msra.mxu0 %v969
        %1000 = vmatprep.subr.mxu0 0.0
        %1001 = vmatpush1.msra.mxu0 %v968
        %1002 = vmatprep.subr.mxu0 0.0
        %1003 = vmatpush1.msra.mxu0 %v967
        %1004 = vmatprep.subr.mxu0 0.0
        %1005 = vmatpush1.msra.mxu0 %v966
        %1006 = vmatprep.subr.mxu0 0.0
        %1007 = vmatpush1.msra.mxu0 %v965
        %1008 = vmatprep.subr.mxu0 0.0
        %1009 = vmatpush1.msra.mxu0 %v964
        %1010 = vmatprep.subr.mxu0 0.0
        %1011 = vmatpush2.msra.mxu0 0.0
        %1012 = vmatprep.subr.mxu0 0.0
        %1013 = vmatpush2.msra.mxu0 0.0
        %1014 = vmatprep.subr.mxu0 0.0
        %1015 = vmatpush2.msra.mxu0 0.0
        %1016 = vmatprep.subr.mxu0 0.0
        %1017 = vmatpush2.msra.mxu0 0.0
        %1018 = vmatprep.subr.mxu0 0.0
        %1019 = vmatpush2.msra.mxu0 0.0
        %1020 = vmatprep.subr.mxu0 0.0
        %1021 = vmatpush2.msra.mxu0 0.0
        %1022 = vmatprep.subr.mxu0 0.0
        %1023 = vmatpush2.msra.mxu0 0.0
        %1024 = vmatprep.subr.mxu0 0.0
        %1025 = vmatpush2.msra.mxu0 0.0
        %1026 = vmatprep.subr.mxu0 0.0
        %1027 = vmatpush2.msra.mxu0 0.0
        %1028 = vmatprep.subr.mxu0 0.0
        %1029 = vmatpush2.msra.mxu0 0.0
        %1030 = vmatprep.subr.mxu0 0.0
        %1031 = vmatpush2.msra.mxu0 0.0
        %1032 = vmatprep.subr.mxu0 0.0
        %1033 = vmatpush2.msra.mxu0 0.0
        %1034 = vmatprep.subr.mxu0 0.0
        %1035 = vmatpush2.msra.mxu0 0.0
        %1036 = vmatprep.subr.mxu0 0.0
        %1037 = vmatpush2.msra.mxu0 0.0
        %1038 = vmatprep.subr.mxu0 0.0
        %1039 = vmatpush2.msra.mxu0 0.0
        %1040 = vmatprep.subr.mxu0 0.0
        %1041 = vmatpush2.msra.mxu0 0.0
        %1042 = vmatprep.mubr.f32.mxu0 0.0
        %1043 = vmatmul.mubr.f32.gmra.mxu0 %v973
        %v1044 = vpop.f32.mrf.mxu0
        %v1045 = vadd.f32 0.0, %v1044
        %v1046 = vpop.f32.mrf.mxu0
        %1047 = vmatprep.mubr.f32.mxu0 0.0
        %1048 = vmatmul.mubr.f32.gmra.mxu0 %v976
        %v1049 = vpop.f32.mrf.mxu0
        %v1050 = vadd.f32 0.0, %v1049
        %v1051 = vpop.f32.mrf.mxu0
        %1052 = vdwg.mxu0
        %v1053 = vadd.f32 %v959, %v1045
        %v1054 = vadd.f32 %v960, %v1050
        %v1055 = vld [vmem:[%s2] sm:$0x1]
        %v1057 = vlaneseq
        %v1058 = vshrl.u32 %v1057, 7
        %v1059 = vsub.s32 0, %v1058
        %v1060 = vrot.slane %v1055, %v1059
        %v1062 = vadd.f32 %v1053, %v1060
        %v1063 = vadd.f32 %v1054, %v1060
        %v1064 = vmax.f32 %v1062, 0.0
        %v1065 = vmax.f32 %v1063, 0.0
        %1066 = vst [vmem:[%s203] sm:$0xff] %v1064
        %1067 = vst [vmem:[%s203 + $0x8] sm:$0xff] %v1065
        %s1068 = sand.u32 %s97, 1
        %s1069 = scalar_lea.sflag [#allocation5], %s1068
        %s1070 = sand.u32 %s97, 1
        %s1071 = smul.addr %s1070, 16
        %s1072 = scalar_lea.vmem [#allocation8], %s1071
        // Predicated region
        $region41: #{tpu_custom_call.1} parent=31 // pred_check
          %p1073 = pneg %p107
        $region42: #{tpu_custom_call.1} parent=31 // pred_check_branch
          %1075 = sbr.rel (%p1073) target = $region44
        $region43: #{tpu_custom_call.1} parent=31 // pred_region
          %s1077 = ssub.s32 256, 256
          %1078 = vsyncadd %s1069, %s1077
          %s1079 = smul.addr %s21, 2
          %s1080 = smul.addr %s1079, 128
          %s1081 = scalar_lea.hbm %s3, %s1080
          %s1082 = sshll.u32 %s1072, 4
          %s1083 = int_to_ptr.vmem [resolvable:$true] %s1082
          %1088 = dma.vmem_to_hbm [thread:$0]  %s1083, 256, %s1081, %s1069, 128, 128, 8
        $region44: #{tpu_custom_call.1} parent=31 // pred_fallthru
          _
      $region32: #{tpu_custom_call.1} parent=5 // pred_fallthru
        _
      %p1089 = scmp.le.s32.totalorder 2, %s16
      // Predicated region
      $region45: #{tpu_custom_call.1} parent=5 // pred_check
        %p1090 = pneg %p1089
      $region46: #{tpu_custom_call.1} parent=5 // pred_check_branch
        %1092 = sbr.rel (%p1090) target = $region48
      $region47: #{tpu_custom_call.1} parent=5 // pred_region
        %s1093 = ssub.s32 %s16, 2
        // Predicated region
        $region49: #{tpu_custom_call.1} parent=47 // pred_check
          %p1094 = pneg %p113
        $region50: #{tpu_custom_call.1} parent=47 // pred_check_branch
          %1096 = sbr.rel (%p1094) target = $region52
        $region51: #{tpu_custom_call.1} parent=47 // pred_region
          %s1097 = sand.u32 %s98, 1
          %s1098 = scalar_lea.sflag [#allocation5], %s1097
          %s1099 = sand.u32 %s98, 1
          %s1100 = smul.addr %s1099, 16
          %s1101 = scalar_lea.vmem [#allocation8], %s1100
          %1102 = dma.done %s1098, 256
        $region52: #{tpu_custom_call.1} parent=47 // pred_fallthru
          _
      $region48: #{tpu_custom_call.1} parent=5 // pred_fallthru
        _
    $region6: #{tpu_custom_call.1} parent=1 // loop_footer
      %s20 = sadd.s32 1, %s16
    $region7: #{tpu_custom_call.1} parent=1 // loop_footer_branch
      %15 = sbr.rel target = $region3
    $region8: #{tpu_custom_call.1} parent=1 // loop_exit
      _
    %1103 = vsyncpa [#allocation4], 1
    %s1104 = scalar_lea.sflag [#allocation4], 1
    %1105 = vsyncpa %s1104, 1
    %1106 = vsyncpa [#allocation7], 1
    %1107 = vsyncpa [#allocation5], 1
    %s1108 = scalar_lea.sflag [#allocation5], 1
    %1109 = vsyncpa %s1108, 1

</llo_original>
